<compile_context>
chip_gen: v6e
topology: v6e:2x2x1
jax: 0.10.0
libtpu: 0.0.40
codegen_flags: <defaults>
</compile_context>

<pallas_src>
import functools

import jax
import jax.numpy as jnp
from jax.experimental import pallas as pl
from jax.experimental.pallas import tpu as pltpu


def _round_up(n: int, m: int) -> int:
    return ((n + m - 1) // m) * m


def mlp_kernel(x_ref, w1t_ref, b1_ref, w2_ref, b2_ref, o_ref):
    # x_ref  : (TILE_B, 13)  VMEM  -- batch tile, features on lanes
    # w1t_ref: (14, 13)      VMEM  -- W1^T, resident across all grid steps
    # b1_ref : (14, 1)       VMEM  -- layer-1 bias as a column
    # w2_ref : (14, 1)       VMEM  -- layer-2 weights as a column
    # b2_ref : (1, 1)        SMEM  -- layer-2 bias (scalar)
    # o_ref  : (1, TILE_B)   VMEM  -- lane-dense output row
    #
    # Layer 1 on the MXU, contracting the shared feature dim (q @ k^T pattern):
    #   h = W1^T @ x^T -> (14, TILE_B), batch on the lane axis.
    h = jax.lax.dot_general(
        w1t_ref[...], x_ref[...],
        dimension_numbers=(((1,), (1,)), ((), ())),
        preferred_element_type=jnp.float32,
    )
    h = jnp.maximum(h + b1_ref[...], 0.0)  # bias + ReLU on the VPU

    # Layer 2 (out_features = 1): VPU broadcast-multiply + small sublane reduce.
    # Result is already a lane-dense (1, TILE_B) row; no MXU pass, no transpose.
    y = jnp.sum(h * w2_ref[...], axis=0, keepdims=True) + b2_ref[0, 0]
    o_ref[...] = y.astype(o_ref.dtype)


@functools.partial(jax.jit, static_argnames=("tile_b",))
def my_model_forward(x, w1, b1, w2, b2, *, tile_b: int = 8192):
    """Forward pass of MyModel: relu(x @ w1 + b1) @ w2 + b2, x: (B, 13) -> (B, 1)."""
    B, d_in = x.shape
    d_hidden = w1.shape[1]

    # Tile the batch; keep the tile a multiple of 128 so the output row stays
    # lane-dense. Small batches shrink the tile instead of over-padding.
    tb = min(tile_b, _round_up(max(B, 1), 128))
    b_pad = _round_up(B, tb)
    if b_pad != B:
        x = jnp.pad(x, ((0, b_pad - B), (0, 0)))
    num_tiles = b_pad // tb

    # Tiny parameter reshapes (13x14 worth of data), done once outside the kernel.
    w1t = jnp.transpose(w1).astype(jnp.float32)            # (14, 13)
    b1_col = b1.reshape(d_hidden, 1).astype(jnp.float32)   # (14, 1)
    w2_col = w2.reshape(d_hidden, 1).astype(jnp.float32)   # (14, 1)
    b2_s = b2.reshape(1, 1).astype(jnp.float32)            # (1, 1) scalar -> SMEM

    out_row = pl.pallas_call(
        mlp_kernel,
        out_shape=jax.ShapeDtypeStruct((1, b_pad), x.dtype),
        grid=(num_tiles,),
        in_specs=[
            pl.BlockSpec((tb, d_in), lambda i: (i, 0)),          # x: tiled over batch
            pl.BlockSpec((d_hidden, d_in), lambda i: (0, 0)),    # W1^T: resident
            pl.BlockSpec((d_hidden, 1), lambda i: (0, 0)),       # b1: resident
            pl.BlockSpec((d_hidden, 1), lambda i: (0, 0)),       # w2: resident
            pl.BlockSpec(memory_space=pltpu.MemorySpace.SMEM),   # b2 scalar in SMEM
        ],
        out_specs=pl.BlockSpec((1, tb), lambda i: (0, i)),       # lane-dense row
        compiler_params=pltpu.CompilerParams(
            dimension_semantics=("parallel",),  # batch tiles across both TCs on v7x
        ),
    )(x, w1t, b1_col, w2_col, b2_s)

    # (1, b_pad) -> (B, 1)
    return out_row.reshape(b_pad, 1)[:B]


def init_params(key):
    # Deterministic init mimicking nn.Linear defaults: U(-1/sqrt(fan_in), 1/sqrt(fan_in)).
    k1, k2, k3, k4 = jax.random.split(key, 4)
    lim1 = 1.0 / jnp.sqrt(13.0)
    lim2 = 1.0 / jnp.sqrt(14.0)
    w1 = jax.random.uniform(k1, (13, 14), jnp.float32, -lim1, lim1)
    b1 = jax.random.uniform(k2, (14,), jnp.float32, -lim1, lim1)
    w2 = jax.random.uniform(k3, (14, 1), jnp.float32, -lim2, lim2)
    b2 = jax.random.uniform(k4, (1,), jnp.float32, -lim2, lim2)
    return w1, b1, w2, b2


if __name__ == "__main__":
    key = jax.random.PRNGKey(0)
    k_x, k_p = jax.random.split(key)
    batch = 8
    x = jax.random.normal(k_x, (batch, 13), jnp.float32)
    w1, b1, w2, b2 = init_params(k_p)

    out = my_model_forward(x, w1, b1, w2, b2)
    out = jax.block_until_ready(out)

    # Reference check in plain JAX.
    ref = jnp.maximum(x @ w1 + b1, 0.0) @ w2 + b2
    assert out.shape == (batch, 1), out.shape
    assert jnp.allclose(out, ref, atol=1e-5, rtol=1e-5)

    # Also exercise the multi-tile path (grid > 1) with a larger batch.
    batch2 = 512
    x2 = jax.random.normal(k_x, (batch2, 13), jnp.float32)
    out2 = jax.block_until_ready(my_model_forward(x2, w1, b1, w2, b2, tile_b=256))
    ref2 = jnp.maximum(x2 @ w1 + b1, 0.0) @ w2 + b2
    assert out2.shape == (batch2, 1)
    assert jnp.allclose(out2, ref2, atol=1e-5, rtol=1e-5)

    print("KERNEL_OK")
</pallas_src>

<mosaic_0001>
module attributes {stable_mosaic.version = 11 : i64} {
  func.func @mlp_kernel(%arg0: i32, %arg1: memref<128x13xf32, #tpu.memory_space<vmem>>, %arg2: memref<14x13xf32, #tpu.memory_space<vmem>>, %arg3: memref<14x1xf32, #tpu.memory_space<vmem>>, %arg4: memref<14x1xf32, #tpu.memory_space<vmem>>, %arg5: memref<1x1xf32, #tpu.memory_space<smem>>, %arg6: memref<1x128xf32, #tpu.memory_space<vmem>>) attributes {dimension_semantics = [#tpu.dimension_semantics<parallel>], iteration_bounds = array<i64: 1>, scalar_prefetch = 0 : i64, scratch_operands = 0 : i64, tpu.core_type = #tpu.core_type<tc>, window_params = [{transform_indices = @transform_0, window_bounds = array<i64: 128, 13>}, {pipeline_mode = #tpu.pipeline_mode<synchronous>, transform_indices = @transform_1, window_bounds = array<i64: 14, 13>}, {pipeline_mode = #tpu.pipeline_mode<synchronous>, transform_indices = @transform_2, window_bounds = array<i64: 14, 1>}, {pipeline_mode = #tpu.pipeline_mode<synchronous>, transform_indices = @transform_3, window_bounds = array<i64: 14, 1>}, {transform_indices = @transform_4, window_bounds = array<i64: 1, 1>}, {transform_indices = @transform_5, window_bounds = array<i64: 1, 128>}]} {
    %c0 = arith.constant 0 : index
    %c0_0 = arith.constant 0 : index
    %0 = vector.load %arg2[%c0, %c0_0] : memref<14x13xf32, #tpu.memory_space<vmem>>, vector<14x13xf32>
    %c0_1 = arith.constant 0 : index
    %c0_2 = arith.constant 0 : index
    %1 = vector.load %arg1[%c0_1, %c0_2] : memref<128x13xf32, #tpu.memory_space<vmem>>, vector<128x13xf32>
    %cst = arith.constant dense<0.000000e+00> : vector<14x128xf32>
    %2 = tpu.matmul %0, %1, %cst {dimension_numbers = #tpu.dot_dimension_numbers<[1], [1], [0], [0], [0, 0, 1, 0], [], []>} : vector<14x13xf32>, vector<128x13xf32>, vector<14x128xf32> -> vector<14x128xf32>
    %c0_3 = arith.constant 0 : index
    %c0_4 = arith.constant 0 : index
    %3 = vector.load %arg3[%c0_3, %c0_4] : memref<14x1xf32, #tpu.memory_space<vmem>>, vector<14x1xf32>
    %4 = vector.broadcast %3 : vector<14x1xf32> to vector<14x128xf32>
    %5 = arith.addf %2, %4 : vector<14x128xf32>
    %cst_5 = arith.constant 0.000000e+00 : f32
    %6 = vector.broadcast %cst_5 : f32 to vector<14x128xf32>
    %7 = arith.maximumf %5, %6 : vector<14x128xf32>
    %c0_6 = arith.constant 0 : index
    %c0_7 = arith.constant 0 : index
    %8 = vector.load %arg4[%c0_6, %c0_7] : memref<14x1xf32, #tpu.memory_space<vmem>>, vector<14x1xf32>
    %9 = vector.broadcast %8 : vector<14x1xf32> to vector<14x128xf32>
    %10 = arith.mulf %7, %9 : vector<14x128xf32>
    %cst_8 = arith.constant dense<0.000000e+00> : vector<128xf32>
    %11 = vector.multi_reduction <add>, %10, %cst_8 [0] : vector<14x128xf32> to vector<128xf32>
    %12 = vector.shape_cast %11 : vector<128xf32> to vector<1x128xf32>
    %c0_9 = arith.constant 0 : index
    %c0_10 = arith.constant 0 : index
    %13 = memref.load %arg5[%c0_9, %c0_10] : memref<1x1xf32, #tpu.memory_space<smem>>
    %14 = vector.broadcast %13 : f32 to vector<1x128xf32>
    %15 = arith.addf %12, %14 : vector<1x128xf32>
    %c0_11 = arith.constant 0 : index
    %c0_12 = arith.constant 0 : index
    %16 = vector.load %arg6[%c0_11, %c0_12] : memref<1x128xf32, #tpu.memory_space<vmem>>, vector<1x128xf32>
    tpu.vector_store %arg6[%c0_11, %c0_12], %15 {strides = array<i32>} : memref<1x128xf32, #tpu.memory_space<vmem>>, vector<1x128xf32>,
    return
  }
  func.func @transform_0(%arg0: i32) -> (i32, i32) {
    %c0_i32 = arith.constant 0 : i32
    %c0_i32_0 = arith.constant 0 : i32
    return %arg0, %c0_i32 : i32, i32
  }
  func.func @transform_1(%arg0: i32) -> (i32, i32) {
    %c0_i32 = arith.constant 0 : i32
    %c0_i32_0 = arith.constant 0 : i32
    %c0_i32_1 = arith.constant 0 : i32
    return %c0_i32, %c0_i32_0 : i32, i32
  }
  func.func @transform_2(%arg0: i32) -> (i32, i32) {
    %c0_i32 = arith.constant 0 : i32
    %c0_i32_0 = arith.constant 0 : i32
    %c0_i32_1 = arith.constant 0 : i32
    return %c0_i32, %c0_i32_0 : i32, i32
  }
  func.func @transform_3(%arg0: i32) -> (i32, i32) {
    %c0_i32 = arith.constant 0 : i32
    %c0_i32_0 = arith.constant 0 : i32
    %c0_i32_1 = arith.constant 0 : i32
    return %c0_i32, %c0_i32_0 : i32, i32
  }
  func.func @transform_4(%arg0: i32) -> (i32, i32) {
    %c0_i32 = arith.constant 0 : i32
    %c0_i32_0 = arith.constant 0 : i32
    %c0_i32_1 = arith.constant 0 : i32
    return %c0_i32, %c0_i32_0 : i32, i32
  }
  func.func @transform_5(%arg0: i32) -> (i32, i32) {
    %c0_i32 = arith.constant 0 : i32
    %c0_i32_0 = arith.constant 0 : i32
    return %c0_i32, %arg0 : i32, i32
  }
}

</mosaic_0001>

<llo_original>
// kernel: my_model_forward.1
$region0: #{my_model_forward.1}
  #allocation0 [shape = 'u32[]', space=smem, size = 0x4, offset = 0x4, fixed_abs, tag = 'smem constant byte address 0x4 - core index']
  #allocation1 [shape = 'u32[144,128]{1,0:T(1,128)}', space=vmem, size = 0x12000, scoped, tag = 'internal scratch']
  #allocation2 [shape = 'f32[1,1]{1,0:T(1,128)S(6)}', space=smem, size = 0x200, scoped, tag = 'scoped memory for my_model_forward.1']
  %s0 = inlined_call_operand.vmem [shape: f32[128,13], index: 0, kind: input, shape index: {}]
  %s1 = inlined_call_operand.vmem [shape: f32[14,13], index: 1, kind: input, shape index: {}]
  %s2 = inlined_call_operand.vmem [shape: f32[14,1], index: 2, kind: input, shape index: {}]
  %s3 = inlined_call_operand.vmem [shape: f32[14,1], index: 3, kind: input, shape index: {}]
  %s4 = inlined_call_operand.<no memory space> [shape: f32[1,1], index: 4, kind: input, shape index: {}]
  %s5 = inlined_call_operand.vmem [shape: f32[1,128], index: 5, kind: output, shape index: {}]
  %s6 = sld [smem:[#allocation0]]
  $region30: #{my_model_forward.1} parent=0
    _
  %s8 = ssub.s32 1, %s6
  %s9 = scalar_select 0, %s8, %s6
  %10 = sst [smem:[#allocation2]] %s4
  // Predicated region
  $region2: #{my_model_forward.1} parent=0 // pred_check
    _
  $region3: #{my_model_forward.1} parent=0 // pred_check_branch
    %12 = sbr.rel (0) target = $region5
  $region4: #{my_model_forward.1} parent=0 // pred_region
    _
  $region5: #{my_model_forward.1} parent=0 // pred_fallthru
    _
  // Predicated region
  $region6: #{my_model_forward.1} parent=0 // pred_check
    _
  $region7: #{my_model_forward.1} parent=0 // pred_check_branch
    %14 = sbr.rel (0) target = $region9
  $region8: #{my_model_forward.1} parent=0 // pred_region
    _
  $region9: #{my_model_forward.1} parent=0 // pred_fallthru
    _
  // Predicated region
  $region10: #{my_model_forward.1} parent=0 // pred_check
    _
  $region11: #{my_model_forward.1} parent=0 // pred_check_branch
    %16 = sbr.rel (0) target = $region13
  $region12: #{my_model_forward.1} parent=0 // pred_region
    _
  $region13: #{my_model_forward.1} parent=0 // pred_fallthru
    _
  // Predicated region
  $region14: #{my_model_forward.1} parent=0 // pred_check
    _
  $region15: #{my_model_forward.1} parent=0 // pred_check_branch
    %18 = sbr.rel (0) target = $region17
  $region16: #{my_model_forward.1} parent=0 // pred_region
    _
  $region17: #{my_model_forward.1} parent=0 // pred_fallthru
    _
  // Predicated region
  $region18: #{my_model_forward.1} parent=0 // pred_check
    _
  $region19: #{my_model_forward.1} parent=0 // pred_check_branch
    %20 = sbr.rel (0) target = $region21
  $region20: #{my_model_forward.1} parent=0 // pred_region
    _
  $region21: #{my_model_forward.1} parent=0 // pred_fallthru
    _
  %v21 = vld [vmem:[%s1] sm:$0xff]
  %v22 = vld [vmem:[%s1 + $0x8] sm:$0x3f]
  %v23 = vld [vmem:[%s0] sm:$0xff]
  %v24 = vld [vmem:[%s0 + $0x8] sm:$0xff]
  %v25 = vld [vmem:[%s0 + $0x10] sm:$0xff]
  %v26 = vld [vmem:[%s0 + $0x18] sm:$0xff]
  %v27 = vld [vmem:[%s0 + $0x20] sm:$0xff]
  %v28 = vld [vmem:[%s0 + $0x28] sm:$0xff]
  %v29 = vld [vmem:[%s0 + $0x30] sm:$0xff]
  %v30 = vld [vmem:[%s0 + $0x38] sm:$0xff]
  %v31 = vld [vmem:[%s0 + $0x40] sm:$0xff]
  %v32 = vld [vmem:[%s0 + $0x48] sm:$0xff]
  %v33 = vld [vmem:[%s0 + $0x50] sm:$0xff]
  %v34 = vld [vmem:[%s0 + $0x58] sm:$0xff]
  %v35 = vld [vmem:[%s0 + $0x60] sm:$0xff]
  %v36 = vld [vmem:[%s0 + $0x68] sm:$0xff]
  %v37 = vld [vmem:[%s0 + $0x70] sm:$0xff]
  %v38 = vld [vmem:[%s0 + $0x78] sm:$0xff]
  %v39 = vld [vmem:[%s2] sm:$0xff]
  %v40 = vld [vmem:[%s2 + $0x8] sm:$0x3f]
  %42 = vset.pattern.permute.xlu0 0
  %43 = vperm.xlu0 %42, %v39
  %v44 = vpop.permute.xlu0 %43
  %47 = vset.pattern.permute.xlu0 0
  %48 = vperm.xlu0 %47, %v40
  %v49 = vpop.permute.xlu0 %48
  %vm51 = vcmask 105472
  %v53 = vsel %vm51, %v21, 0
  %v56 = vsel %vm51, %v22, 0
  %v59 = vsel %vm51, %v23, 0
  %v62 = vsel %vm51, %v24, 0
  %v65 = vsel %vm51, %v25, 0
  %v68 = vsel %vm51, %v26, 0
  %v71 = vsel %vm51, %v27, 0
  %v74 = vsel %vm51, %v28, 0
  %v77 = vsel %vm51, %v29, 0
  %v80 = vsel %vm51, %v30, 0
  %v83 = vsel %vm51, %v31, 0
  %v86 = vsel %vm51, %v32, 0
  %v89 = vsel %vm51, %v33, 0
  %v92 = vsel %vm51, %v34, 0
  %v95 = vsel %vm51, %v35, 0
  %v98 = vsel %vm51, %v36, 0
  %v101 = vsel %vm51, %v37, 0
  %v104 = vsel %vm51, %v38, 0
  %106 = vmatprep.subr.mxu0 0.0
  %107 = vmatpush1.xpose.msra.mxu0 %v104
  %108 = vmatprep.subr.mxu0 0.0
  %109 = vmatpush1.xpose.msra.mxu0 %v101
  %110 = vmatprep.subr.mxu0 0.0
  %111 = vmatpush1.xpose.msra.mxu0 %v98
  %112 = vmatprep.subr.mxu0 0.0
  %113 = vmatpush1.xpose.msra.mxu0 %v95
  %114 = vmatprep.subr.mxu0 0.0
  %115 = vmatpush1.xpose.msra.mxu0 %v92
  %116 = vmatprep.subr.mxu0 0.0
  %117 = vmatpush1.xpose.msra.mxu0 %v89
  %118 = vmatprep.subr.mxu0 0.0
  %119 = vmatpush1.xpose.msra.mxu0 %v86
  %120 = vmatprep.subr.mxu0 0.0
  %121 = vmatpush1.xpose.msra.mxu0 %v83
  %122 = vmatprep.subr.mxu0 0.0
  %123 = vmatpush1.xpose.msra.mxu0 %v80
  %124 = vmatprep.subr.mxu0 0.0
  %125 = vmatpush1.xpose.msra.mxu0 %v77
  %126 = vmatprep.subr.mxu0 0.0
  %127 = vmatpush1.xpose.msra.mxu0 %v74
  %128 = vmatprep.subr.mxu0 0.0
  %129 = vmatpush1.xpose.msra.mxu0 %v71
  %130 = vmatprep.subr.mxu0 0.0
  %131 = vmatpush1.xpose.msra.mxu0 %v68
  %132 = vmatprep.subr.mxu0 0.0
  %133 = vmatpush1.xpose.msra.mxu0 %v65
  %134 = vmatprep.subr.mxu0 0.0
  %135 = vmatpush1.xpose.msra.mxu0 %v62
  %136 = vmatprep.subr.mxu0 0.0
  %137 = vmatpush1.xpose.msra.mxu0 %v59
  %138 = vmatprep.subr.mxu0 0.0
  %139 = vmatpush2.xpose.msra.mxu0 0.0
  %140 = vmatprep.subr.mxu0 0.0
  %141 = vmatpush2.xpose.msra.mxu0 0.0
  %142 = vmatprep.subr.mxu0 0.0
  %143 = vmatpush2.xpose.msra.mxu0 0.0
  %144 = vmatprep.subr.mxu0 0.0
  %145 = vmatpush2.xpose.msra.mxu0 0.0
  %146 = vmatprep.subr.mxu0 0.0
  %147 = vmatpush2.xpose.msra.mxu0 0.0
  %148 = vmatprep.subr.mxu0 0.0
  %149 = vmatpush2.xpose.msra.mxu0 0.0
  %150 = vmatprep.subr.mxu0 0.0
  %151 = vmatpush2.xpose.msra.mxu0 0.0
  %152 = vmatprep.subr.mxu0 0.0
  %153 = vmatpush2.xpose.msra.mxu0 0.0
  %154 = vmatprep.subr.mxu0 0.0
  %155 = vmatpush2.xpose.msra.mxu0 0.0
  %156 = vmatprep.subr.mxu0 0.0
  %157 = vmatpush2.xpose.msra.mxu0 0.0
  %158 = vmatprep.subr.mxu0 0.0
  %159 = vmatpush2.xpose.msra.mxu0 0.0
  %160 = vmatprep.subr.mxu0 0.0
  %161 = vmatpush2.xpose.msra.mxu0 0.0
  %162 = vmatprep.subr.mxu0 0.0
  %163 = vmatpush2.xpose.msra.mxu0 0.0
  %164 = vmatprep.subr.mxu0 0.0
  %165 = vmatpush2.xpose.msra.mxu0 0.0
  %166 = vmatprep.subr.mxu0 0.0
  %167 = vmatpush2.xpose.msra.mxu0 0.0
  %168 = vmatprep.subr.mxu0 0.0
  %169 = vmatpush2.xpose.msra.mxu0 0.0
  %170 = vmatprep.mubr.f32.mxu0 0.0
  %171 = vmatmul.mubr.f32.gmra.mxu0 %v53
  %v172 = vpop.f32.mrf.mxu0
  %v173 = vadd.f32 %v44, %v172
  %v174 = vpop.f32.mrf.mxu0
  %175 = vmatprep.mubr.f32.mxu0 0.0
  %176 = vmatmul.mubr.f32.gmra.mxu0 %v56
  %v177 = vpop.f32.mrf.mxu0
  %v178 = vadd.f32 %v49, %v177
  %v179 = vpop.f32.mrf.mxu0
  %180 = vdwg.mxu0
  %v181 = vmax.f32 %v173, 0.0
  %v182 = vmax.f32 %v178, 0.0
  %v183 = vld [vmem:[%s3] sm:$0xff]
  %v184 = vld [vmem:[%s3 + $0x8] sm:$0x3f]
  %186 = vset.pattern.permute.xlu0 0
  %187 = vperm.xlu0 %186, %v183
  %v188 = vpop.permute.xlu0 %187
  %191 = vset.pattern.permute.xlu0 0
  %192 = vperm.xlu0 %191, %v184
  %v193 = vpop.permute.xlu0 %192
  %v195 = vmul.f32 %v181, %v188
  %v196 = vmul.f32 %v182, %v193
  %vm197 = vcmask 1045504
  %v198 = vsel %vm197, %v196, 0.0
  %v199 = vadd.f32 %v195, %v198
  %v200 = vrot.slane %v199, 4
  %v201 = vadd.f32 %v199, %v200
  %v202 = vrot.slane %v201, 2
  %v203 = vadd.f32 %v201, %v202
  %v204 = vrot.slane %v203, 1
  %v205 = vadd.f32 %v203, %v204
  %s206 = sld [smem:[#allocation2]]
  %v207 = vstv %s206
  %v208 = vadd.f32 %v205, %v207
  %209 = vst [vmem:[%s5] sm:$0x1] %v208
  // Predicated region
  $region22: #{my_model_forward.1} parent=0 // pred_check
    _
  $region23: #{my_model_forward.1} parent=0 // pred_check_branch
    %211 = sbr.rel (0) target = $region25
  $region24: #{my_model_forward.1} parent=0 // pred_region
    _
  $region25: #{my_model_forward.1} parent=0 // pred_fallthru
    _
  // Predicated region
  $region26: #{my_model_forward.1} parent=0 // pred_check
    _
  $region27: #{my_model_forward.1} parent=0 // pred_check_branch
    %213 = sbr.rel (0) target = $region29
  $region28: #{my_model_forward.1} parent=0 // pred_region
    _
  $region29: #{my_model_forward.1} parent=0 // pred_fallthru
    _

</llo_original>
